<compile_context>
chip_gen: v7x
topology: tpu7x:2x2x1
jax: 0.10.0
libtpu: 0.0.40
codegen_flags: <defaults>
</compile_context>

<pallas_src>
import jax
import jax.numpy as jnp
from jax.experimental import pallas as pl
from jax.experimental.pallas import tpu as pltpu


def _round_up(x, m):
    return ((x + m - 1) // m) * m


def _bayes_linear_sample_kernel(x_ref, wt_ref, b_ref, wvar_t_ref, bvar_ref,
                                noise_ref, o_ref):
    """One (tm, tn) output tile of the sampling forward pass.

    x_ref:      (tm, K)   input tile
    wt_ref:     (K, tn)   W^T tile         (depends only on the N grid index)
    b_ref:      (1, tn)   bias tile
    wvar_t_ref: (K, tn)   softplus(w_rho)^2, transposed (precomputed in wrapper)
    bvar_ref:   (1, tn)   softplus(b_rho)^2
    noise_ref:  (tm, tn)  standard-normal noise tile
    o_ref:      (tm, tn)  output tile
    """
    x = x_ref[...].astype(jnp.float32)
    mean = jnp.dot(x, wt_ref[...], preferred_element_type=jnp.float32) + b_ref[...]
    var = jnp.dot(x * x, wvar_t_ref[...],
                  preferred_element_type=jnp.float32) + bvar_ref[...]
    pred = mean + noise_ref[...].astype(jnp.float32) * jnp.sqrt(var)
    o_ref[...] = pred.astype(o_ref.dtype)


def _bayes_linear_mean_kernel(x_ref, wt_ref, b_ref, o_ref):
    """sample=False path: plain linear layer tile."""
    x = x_ref[...].astype(jnp.float32)
    mean = jnp.dot(x, wt_ref[...], preferred_element_type=jnp.float32) + b_ref[...]
    o_ref[...] = mean.astype(o_ref.dtype)


def bayes_linear_forward(x, w, b, w_rho, b_rho, noise=None, *,
                         sample=True, tm_max=256, tn_max=512):
    """x: (M, K); w, w_rho: (N, K); b, b_rho: (N,); noise: (M, N) if sample."""
    M, K = x.shape
    N = w.shape[0]
    itemsize = jnp.dtype(x.dtype).itemsize

    # ---- tile selection (lane-dense N, large M tile) -------------------------
    tm = min(int(tm_max), _round_up(M, 8))
    M_pad = _round_up(M, tm)

    N_pad = _round_up(N, 128)
    if N_pad <= tn_max:
        tn = N_pad
    elif N_pad % tn_max == 0:
        tn = int(tn_max)
    elif N_pad % 256 == 0 and tn_max >= 256:
        tn = 256
    else:
        tn = 128  # N_pad is always a multiple of 128

    def pad2(a, rows, cols):
        pr, pc = rows - a.shape[0], cols - a.shape[1]
        if pr or pc:
            a = jnp.pad(a, ((0, pr), (0, pc)))
        return a

    # ---- hoisted parameter transforms + layout glue --------------------------
    wt_p = pad2(w.T, K, N_pad)                                  # (K, N_pad)
    b_p = pad2(b.reshape(1, N), 1, N_pad)                       # (1, N_pad)
    x_p = pad2(x, M_pad, K)                                     # (M_pad, K)

    if sample:
        if noise is None:
            raise ValueError("sample=True requires a noise array of shape (M, N)")
        # Stable softplus, computed once per call (NOT per grid step).
        w_var = jnp.square(jax.nn.softplus(w_rho))              # (N, K)
        b_var = jnp.square(jax.nn.softplus(b_rho))              # (N,)
        wvar_t_p = pad2(w_var.T, K, N_pad)                      # (K, N_pad)
        bvar_p = pad2(b_var.reshape(1, N), 1, N_pad)            # (1, N_pad)
        noise_p = pad2(noise, M_pad, N_pad)                     # (M_pad, N_pad)

    # ---- specs ---------------------------------------------------------------
    grid = (M_pad // tm, N_pad // tn)
    x_spec = pl.BlockSpec((tm, K), lambda i, j: (i, 0))
    w_spec = pl.BlockSpec((K, tn), lambda i, j: (0, j))
    v_spec = pl.BlockSpec((1, tn), lambda i, j: (0, j))
    mn_spec = pl.BlockSpec((tm, tn), lambda i, j: (i, j))

    if sample:
        kernel = _bayes_linear_sample_kernel
        in_specs = [x_spec, w_spec, v_spec, w_spec, v_spec, mn_spec]
        args = (x_p, wt_p, b_p, wvar_t_p, bvar_p, noise_p)
    else:
        kernel = _bayes_linear_mean_kernel
        in_specs = [x_spec, w_spec, v_spec]
        args = (x_p, wt_p, b_p)

    # ---- cost estimate (advisory) -------------------------------------------
    n_matmuls = 2 if sample else 1
    flops = 2 * M_pad * K * N_pad * n_matmuls + (4 if sample else 1) * M_pad * N_pad
    bytes_accessed = sum(int(a.size) * itemsize for a in args) + M_pad * N_pad * itemsize
    cost = pl.CostEstimate(flops=int(flops),
                           transcendentals=int(M_pad * N_pad if sample else 0),
                           bytes_accessed=int(bytes_accessed))

    out = pl.pallas_call(
        kernel,
        out_shape=jax.ShapeDtypeStruct((M_pad, N_pad), x.dtype),
        grid_spec=pltpu.PrefetchScalarGridSpec(
            num_scalar_prefetch=0,
            grid=grid,
            in_specs=in_specs,
            out_specs=mn_spec,
        ),
        compiler_params=pltpu.CompilerParams(
            dimension_semantics=("parallel", "parallel"),
            vmem_limit_bytes=48 * 1024 * 1024,   # fits v7x's 64 MiB physical VMEM
        ),
        cost_estimate=cost,
    )(*args)

    if M_pad != M or N_pad != N:
        out = out[:M, :N]
    return out


def _reference(x, w, b, w_rho, b_rho, noise, sample=True):
    pred = x @ w.T + b
    if not sample:
        return pred
    w_var = jnp.square(jax.nn.softplus(w_rho))
    b_var = jnp.square(jax.nn.softplus(b_rho))
    pred_std = jnp.sqrt((x ** 2) @ w_var.T + b_var)
    return pred + noise * pred_std


if __name__ == "__main__":
    # Shapes consistent with nn.Linear(in_features=32, out_features=64) applied
    # to a batch of 16 vectors.
    M, K, N = 16, 32, 64
    std_init = 0.0486
    rho_init = float(jnp.log(jnp.exp(jnp.asarray(std_init)) - 1.0))  # std_to_rho

    key = jax.random.PRNGKey(0)
    kx, kw, kb, kn = jax.random.split(key, 4)

    x = jax.random.normal(kx, (M, K), dtype=jnp.float32)
    bound = 1.0 / (K ** 0.5)
    w = jax.random.uniform(kw, (N, K), minval=-bound, maxval=bound, dtype=jnp.float32)
    b = jax.random.uniform(kb, (N,), minval=-bound, maxval=bound, dtype=jnp.float32)
    w_rho = jnp.full((N, K), rho_init, dtype=jnp.float32)
    b_rho = jnp.full((N,), rho_init, dtype=jnp.float32)
    noise = jax.random.normal(kn, (M, N), dtype=jnp.float32)  # torch.randn_like(pred)

    # sample=True path (full Bayes-by-Backprop forward).
    out = bayes_linear_forward(x, w, b, w_rho, b_rho, noise, sample=True)
    out = jax.block_until_ready(out)
    ref = _reference(x, w, b, w_rho, b_rho, noise, sample=True)
    assert jnp.allclose(out, ref, atol=2e-5, rtol=2e-5), "sample=True mismatch"

    # sample=False path (plain linear).
    out_mean = bayes_linear_forward(x, w, b, w_rho, b_rho, sample=False)
    out_mean = jax.block_until_ready(out_mean)
    ref_mean = _reference(x, w, b, w_rho, b_rho, noise, sample=False)
    assert jnp.allclose(out_mean, ref_mean, atol=2e-5, rtol=2e-5), "sample=False mismatch"

    # Second, non-aligned shape to exercise M/N padding and a multi-tile grid
    # (forced small tiles so grid=(3, 2)).
    M2, K2, N2 = 40, 24, 200
    kx2, kw2, kb2, kn2 = jax.random.split(jax.random.PRNGKey(1), 4)
    x2 = jax.random.normal(kx2, (M2, K2), dtype=jnp.float32)
    bound2 = 1.0 / (K2 ** 0.5)
    w2 = jax.random.uniform(kw2, (N2, K2), minval=-bound2, maxval=bound2, dtype=jnp.float32)
    b2 = jax.random.uniform(kb2, (N2,), minval=-bound2, maxval=bound2, dtype=jnp.float32)
    w_rho2 = jnp.full((N2, K2), rho_init, dtype=jnp.float32)
    b_rho2 = jnp.full((N2,), rho_init, dtype=jnp.float32)
    noise2 = jax.random.normal(kn2, (M2, N2), dtype=jnp.float32)

    out2 = bayes_linear_forward(x2, w2, b2, w_rho2, b_rho2, noise2,
                                sample=True, tm_max=16, tn_max=128)
    out2 = jax.block_until_ready(out2)
    ref2 = _reference(x2, w2, b2, w_rho2, b_rho2, noise2, sample=True)
    assert jnp.allclose(out2, ref2, atol=2e-5, rtol=2e-5), "padded/tiled mismatch"

    print("KERNEL_OK")
</pallas_src>

<mosaic_0001>
module attributes {stable_mosaic.version = 11 : i64} {
  func.func @_bayes_linear_sample_kernel(%arg0: i32, %arg1: i32, %arg2: memref<16x32xf32, #tpu.memory_space<vmem>>, %arg3: memref<32x128xf32, #tpu.memory_space<vmem>>, %arg4: memref<1x128xf32, #tpu.memory_space<vmem>>, %arg5: memref<32x128xf32, #tpu.memory_space<vmem>>, %arg6: memref<1x128xf32, #tpu.memory_space<vmem>>, %arg7: memref<16x128xf32, #tpu.memory_space<vmem>>, %arg8: memref<16x128xf32, #tpu.memory_space<vmem>>) attributes {dimension_semantics = [#tpu.dimension_semantics<parallel>, #tpu.dimension_semantics<parallel>], iteration_bounds = array<i64: 1, 1>, scalar_prefetch = 0 : i64, scratch_operands = 0 : i64, tpu.core_type = #tpu.core_type<tc>, window_params = [{transform_indices = @transform_0, window_bounds = array<i64: 16, 32>}, {transform_indices = @transform_1, window_bounds = array<i64: 32, 128>}, {transform_indices = @transform_2, window_bounds = array<i64: 1, 128>}, {transform_indices = @transform_3, window_bounds = array<i64: 32, 128>}, {transform_indices = @transform_4, window_bounds = array<i64: 1, 128>}, {transform_indices = @transform_5, window_bounds = array<i64: 16, 128>}, {transform_indices = @transform_6, window_bounds = array<i64: 16, 128>}]} {
    %c0 = arith.constant 0 : index
    %c0_0 = arith.constant 0 : index
    %0 = vector.load %arg2[%c0, %c0_0] : memref<16x32xf32, #tpu.memory_space<vmem>>, vector<16x32xf32>
    %c0_1 = arith.constant 0 : index
    %c0_2 = arith.constant 0 : index
    %1 = vector.load %arg3[%c0_1, %c0_2] : memref<32x128xf32, #tpu.memory_space<vmem>>, vector<32x128xf32>
    %cst = arith.constant dense<0.000000e+00> : vector<16x128xf32>
    %2 = tpu.matmul %0, %1, %cst {dimension_numbers = #tpu.dot_dimension_numbers<[1], [0], [0], [1], [0, 0, 1, 1], [], []>} : vector<16x32xf32>, vector<32x128xf32>, vector<16x128xf32> -> vector<16x128xf32>
    %c0_3 = arith.constant 0 : index
    %c0_4 = arith.constant 0 : index
    %3 = vector.load %arg4[%c0_3, %c0_4] : memref<1x128xf32, #tpu.memory_space<vmem>>, vector<1x128xf32>
    %4 = vector.broadcast %3 : vector<1x128xf32> to vector<16x128xf32>
    %5 = arith.addf %2, %4 : vector<16x128xf32>
    %6 = arith.mulf %0, %0 : vector<16x32xf32>
    %c0_5 = arith.constant 0 : index
    %c0_6 = arith.constant 0 : index
    %7 = vector.load %arg5[%c0_5, %c0_6] : memref<32x128xf32, #tpu.memory_space<vmem>>, vector<32x128xf32>
    %cst_7 = arith.constant dense<0.000000e+00> : vector<16x128xf32>
    %8 = tpu.matmul %6, %7, %cst_7 {dimension_numbers = #tpu.dot_dimension_numbers<[1], [0], [0], [1], [0, 0, 1, 1], [], []>} : vector<16x32xf32>, vector<32x128xf32>, vector<16x128xf32> -> vector<16x128xf32>
    %c0_8 = arith.constant 0 : index
    %c0_9 = arith.constant 0 : index
    %9 = vector.load %arg6[%c0_8, %c0_9] : memref<1x128xf32, #tpu.memory_space<vmem>>, vector<1x128xf32>
    %10 = vector.broadcast %9 : vector<1x128xf32> to vector<16x128xf32>
    %11 = arith.addf %8, %10 : vector<16x128xf32>
    %c0_10 = arith.constant 0 : index
    %c0_11 = arith.constant 0 : index
    %12 = vector.load %arg7[%c0_10, %c0_11] : memref<16x128xf32, #tpu.memory_space<vmem>>, vector<16x128xf32>
    %13 = math.sqrt %11 : vector<16x128xf32>
    %14 = arith.mulf %12, %13 : vector<16x128xf32>
    %15 = arith.addf %5, %14 : vector<16x128xf32>
    %c0_12 = arith.constant 0 : index
    %c0_13 = arith.constant 0 : index
    %16 = vector.load %arg8[%c0_12, %c0_13] : memref<16x128xf32, #tpu.memory_space<vmem>>, vector<16x128xf32>
    tpu.vector_store %arg8[%c0_12, %c0_13], %15 {strides = array<i32>} : memref<16x128xf32, #tpu.memory_space<vmem>>, vector<16x128xf32>,
    return
  }
  func.func @transform_0(%arg0: i32, %arg1: i32) -> (i32, i32) {
    %c0_i32 = arith.constant 0 : i32
    %c0_i32_0 = arith.constant 0 : i32
    return %arg0, %c0_i32 : i32, i32
  }
  func.func @transform_1(%arg0: i32, %arg1: i32) -> (i32, i32) {
    %c0_i32 = arith.constant 0 : i32
    %c0_i32_0 = arith.constant 0 : i32
    return %c0_i32, %arg1 : i32, i32
  }
  func.func @transform_2(%arg0: i32, %arg1: i32) -> (i32, i32) {
    %c0_i32 = arith.constant 0 : i32
    %c0_i32_0 = arith.constant 0 : i32
    return %c0_i32, %arg1 : i32, i32
  }
  func.func @transform_3(%arg0: i32, %arg1: i32) -> (i32, i32) {
    %c0_i32 = arith.constant 0 : i32
    %c0_i32_0 = arith.constant 0 : i32
    return %c0_i32, %arg1 : i32, i32
  }
  func.func @transform_4(%arg0: i32, %arg1: i32) -> (i32, i32) {
    %c0_i32 = arith.constant 0 : i32
    %c0_i32_0 = arith.constant 0 : i32
    return %c0_i32, %arg1 : i32, i32
  }
  func.func @transform_5(%arg0: i32, %arg1: i32) -> (i32, i32) {
    %c0_i32 = arith.constant 0 : i32
    return %arg0, %arg1 : i32, i32
  }
  func.func @transform_6(%arg0: i32, %arg1: i32) -> (i32, i32) {
    %c0_i32 = arith.constant 0 : i32
    return %arg0, %arg1 : i32, i32
  }
}

</mosaic_0001>

<llo_original>
// kernel: tpu_custom_call.1
$region0: #{tpu_custom_call.1}
  #allocation0 [shape = 'u32[]', space=smem, size = 0x4, offset = 0x4, fixed_abs, tag = 'smem constant byte address 0x4 - core index']
  #allocation1 [shape = 'u32[144,128]{1,0:T(1,128)}', space=vmem, size = 0x12000, scoped, tag = 'internal scratch']
  %s0 = inlined_call_operand.hbm [shape: f32[16,32], index: 0, kind: input, shape index: {}]
  %s1 = inlined_call_operand.hbm [shape: f32[32,128], index: 1, kind: input, shape index: {}]
  %s2 = inlined_call_operand.vmem [shape: f32[1,128], index: 2, kind: input, shape index: {}]
  %s3 = inlined_call_operand.hbm [shape: f32[32,128], index: 3, kind: input, shape index: {}]
  %s4 = inlined_call_operand.vmem [shape: f32[1,128], index: 4, kind: input, shape index: {}]
  %s5 = inlined_call_operand.vmem [shape: f32[16,128], index: 5, kind: input, shape index: {}]
  %s6 = inlined_call_operand.hbm [shape: f32[16,128], index: 6, kind: output, shape index: {}]
  %s7 = sld [smem:[#allocation0]]
  $region46: #{tpu_custom_call.1} parent=0
    _
  %s9 = ssub.s32 1, %s7
  %s10 = scalar_select 0, %s9, %s7
  $region1: #{tpu_custom_call.1} parent=0
    #allocation2 [shape = 'u8[8192]{0}', space=vmem, size = 0x2000, scoped, tag = 'input window, operand 0, single buffered']
    #allocation3 [shape = 's32[1]{0}', space=sflag, size = 0x4, scoped, tag = 'scoped memory for tpu_custom_call.1']
    #allocation4 [shape = 's32[1]{0}', space=sflag, size = 0x4, scoped, tag = 'scoped memory for tpu_custom_call.1']
    #allocation5 [shape = 'u8[16384]{0}', space=vmem, size = 0x4000, scoped, tag = 'input window, operand 1, single buffered']
    #allocation6 [shape = 's32[1]{0}', space=sflag, size = 0x4, scoped, tag = 'scoped memory for tpu_custom_call.1']
    #allocation7 [shape = 'u8[16384]{0}', space=vmem, size = 0x4000, scoped, tag = 'input window, operand 3, single buffered']
    #allocation8 [shape = 'u8[8192]{0}', space=vmem, size = 0x2000, scoped, tag = 'output window, operand 0, single buffered']
    %11 = vsyncpa [#allocation3], 0
    %12 = vsyncpa [#allocation6], 0
    %13 = vsyncpa [#allocation4], 0
    // Predicated region
    $region2: #{tpu_custom_call.1} parent=1 // pred_check
      _
    $region3: #{tpu_custom_call.1} parent=1 // pred_check_branch
      %15 = sbr.rel (0) target = $region5
    $region4: #{tpu_custom_call.1} parent=1 // pred_region
      %s17 = ssub.s32 256, 256
      %18 = vsyncadd [#allocation3], %s17
      %s19 = sshll.u32 [#allocation2], 4
      %s20 = int_to_ptr.vmem [resolvable:$true] %s19
      %25 = dma.hbm_to_vmem [thread:$0]  %s0, 256, %s20, [#allocation3], 128, 128, 8
    $region5: #{tpu_custom_call.1} parent=1 // pred_fallthru
      _
    // Predicated region
    $region6: #{tpu_custom_call.1} parent=1 // pred_check
      _
    $region7: #{tpu_custom_call.1} parent=1 // pred_check_branch
      %27 = sbr.rel (0) target = $region9
    $region8: #{tpu_custom_call.1} parent=1 // pred_region
      %s29 = ssub.s32 512, 512
      %30 = vsyncadd [#allocation6], %s29
      %s31 = sshll.u32 [#allocation5], 4
      %s32 = int_to_ptr.vmem [resolvable:$true] %s31
      %37 = dma.hbm_to_vmem [thread:$0]  %s1, 512, %s32, [#allocation6], 128, 128, 8
    $region9: #{tpu_custom_call.1} parent=1 // pred_fallthru
      _
    // Predicated region
    $region10: #{tpu_custom_call.1} parent=1 // pred_check
      _
    $region11: #{tpu_custom_call.1} parent=1 // pred_check_branch
      %39 = sbr.rel (0) target = $region13
    $region12: #{tpu_custom_call.1} parent=1 // pred_region
      _
    $region13: #{tpu_custom_call.1} parent=1 // pred_fallthru
      _
    // Predicated region
    $region14: #{tpu_custom_call.1} parent=1 // pred_check
      _
    $region15: #{tpu_custom_call.1} parent=1 // pred_check_branch
      %41 = sbr.rel (0) target = $region17
    $region16: #{tpu_custom_call.1} parent=1 // pred_region
      %s43 = ssub.s32 512, 512
      %44 = vsyncadd [#allocation6], %s43
      %s45 = sshll.u32 [#allocation7], 4
      %s46 = int_to_ptr.vmem [resolvable:$true] %s45
      %51 = dma.hbm_to_vmem [thread:$0]  %s3, 512, %s46, [#allocation6], 128, 128, 8
    $region17: #{tpu_custom_call.1} parent=1 // pred_fallthru
      _
    // Predicated region
    $region18: #{tpu_custom_call.1} parent=1 // pred_check
      _
    $region19: #{tpu_custom_call.1} parent=1 // pred_check_branch
      %53 = sbr.rel (0) target = $region21
    $region20: #{tpu_custom_call.1} parent=1 // pred_region
      _
    $region21: #{tpu_custom_call.1} parent=1 // pred_fallthru
      _
    // Predicated region
    $region22: #{tpu_custom_call.1} parent=1 // pred_check
      _
    $region23: #{tpu_custom_call.1} parent=1 // pred_check_branch
      %55 = sbr.rel (0) target = $region25
    $region24: #{tpu_custom_call.1} parent=1 // pred_region
      _
    $region25: #{tpu_custom_call.1} parent=1 // pred_fallthru
      _
    // Predicated region
    $region26: #{tpu_custom_call.1} parent=1 // pred_check
      _
    $region27: #{tpu_custom_call.1} parent=1 // pred_check_branch
      %57 = sbr.rel (0) target = $region29
    $region28: #{tpu_custom_call.1} parent=1 // pred_region
      %58 = dma.done [#allocation3], 256
    $region29: #{tpu_custom_call.1} parent=1 // pred_fallthru
      _
    // Predicated region
    $region30: #{tpu_custom_call.1} parent=1 // pred_check
      _
    $region31: #{tpu_custom_call.1} parent=1 // pred_check_branch
      %60 = sbr.rel (0) target = $region33
    $region32: #{tpu_custom_call.1} parent=1 // pred_region
      %61 = dma.done [#allocation6], 512
    $region33: #{tpu_custom_call.1} parent=1 // pred_fallthru
      _
    // Predicated region
    $region34: #{tpu_custom_call.1} parent=1 // pred_check
      _
    $region35: #{tpu_custom_call.1} parent=1 // pred_check_branch
      %63 = sbr.rel (0) target = $region37
    $region36: #{tpu_custom_call.1} parent=1 // pred_region
      %64 = dma.done [#allocation6], 512
    $region37: #{tpu_custom_call.1} parent=1 // pred_fallthru
      _
    %v65 = vld [vmem:[#allocation2] sm:$0xff]
    %v66 = vld [vmem:[#allocation2 + $0x8] sm:$0xff]
    %v67 = vld [vmem:[#allocation5] sm:$0xff]
    %v68 = vld [vmem:[#allocation5 + $0x8] sm:$0xff]
    %v69 = vld [vmem:[#allocation5 + $0x10] sm:$0xff]
    %v70 = vld [vmem:[#allocation5 + $0x18] sm:$0xff]
    %v71 = vld [vmem:[%s2] sm:$0x1]
    %v73 = vlaneseq
    %v74 = vshrl.u32 %v73, 7
    %v75 = vsub.s32 0, %v74
    %v76 = vrot.slane %v71, %v75
    %vm78 = vcmask 261120
    %v80 = vsel %vm78, %v65, 0
    %v83 = vsel %vm78, %v66, 0
    %85 = vmatprep.subr.mxu0 0.0
    %86 = vmatpush1.msra.mxu0 %v67
    %87 = vmatprep.subr.mxu0 0.0
    %88 = vmatpush1.msra.mxu0 %v68
    %89 = vmatprep.subr.mxu0 0.0
    %90 = vmatpush1.msra.mxu0 %v69
    %91 = vmatprep.subr.mxu0 0.0
    %92 = vmatpush1.msra.mxu0 %v70
    %93 = vmatprep.subr.mxu0 0.0
    %94 = vmatpush1.msra.mxu0 0.0
    %95 = vmatprep.subr.mxu0 0.0
    %96 = vmatpush1.msra.mxu0 0.0
    %97 = vmatprep.subr.mxu0 0.0
    %98 = vmatpush1.msra.mxu0 0.0
    %99 = vmatprep.subr.mxu0 0.0
    %100 = vmatpush1.msra.mxu0 0.0
    %101 = vmatprep.subr.mxu0 0.0
    %102 = vmatpush1.msra.mxu0 0.0
    %103 = vmatprep.subr.mxu0 0.0
    %104 = vmatpush1.msra.mxu0 0.0
    %105 = vmatprep.subr.mxu0 0.0
    %106 = vmatpush1.msra.mxu0 0.0
    %107 = vmatprep.subr.mxu0 0.0
    %108 = vmatpush1.msra.mxu0 0.0
    %109 = vmatprep.subr.mxu0 0.0
    %110 = vmatpush1.msra.mxu0 0.0
    %111 = vmatprep.subr.mxu0 0.0
    %112 = vmatpush1.msra.mxu0 0.0
    %113 = vmatprep.subr.mxu0 0.0
    %114 = vmatpush1.msra.mxu0 0.0
    %115 = vmatprep.subr.mxu0 0.0
    %116 = vmatpush1.msra.mxu0 0.0
    %117 = vmatprep.subr.mxu0 0.0
    %118 = vmatpush1.msra.mxu0 0.0
    %119 = vmatprep.subr.mxu0 0.0
    %120 = vmatpush1.msra.mxu0 0.0
    %121 = vmatprep.subr.mxu0 0.0
    %122 = vmatpush1.msra.mxu0 0.0
    %123 = vmatprep.subr.mxu0 0.0
    %124 = vmatpush1.msra.mxu0 0.0
    %125 = vmatprep.subr.mxu0 0.0
    %126 = vmatpush1.msra.mxu0 0.0
    %127 = vmatprep.subr.mxu0 0.0
    %128 = vmatpush1.msra.mxu0 0.0
    %129 = vmatprep.subr.mxu0 0.0
    %130 = vmatpush1.msra.mxu0 0.0
    %131 = vmatprep.subr.mxu0 0.0
    %132 = vmatpush1.msra.mxu0 0.0
    %133 = vmatprep.subr.mxu0 0.0
    %134 = vmatpush1.msra.mxu0 0.0
    %135 = vmatprep.subr.mxu0 0.0
    %136 = vmatpush1.msra.mxu0 0.0
    %137 = vmatprep.subr.mxu0 0.0
    %138 = vmatpush1.msra.mxu0 0.0
    %139 = vmatprep.subr.mxu0 0.0
    %140 = vmatpush1.msra.mxu0 0.0
    %141 = vmatprep.subr.mxu0 0.0
    %142 = vmatpush1.msra.mxu0 0.0
    %143 = vmatprep.subr.mxu0 0.0
    %144 = vmatpush1.msra.mxu0 0.0
    %145 = vmatprep.subr.mxu0 0.0
    %146 = vmatpush1.msra.mxu0 0.0
    %147 = vmatprep.subr.mxu0 0.0
    %148 = vmatpush1.msra.mxu0 0.0
    %149 = vmatprep.mubr.f32.mxu0 0.0
    %150 = vmatmul.mubr.f32.gmra.mrb[0].mxu0 %v80
    %v151 = vpop.f32.mrb[0].mxu0
    %v152 = vadd.f32 %v76, %v151
    %v153 = vpop.f32.mrb[0].mxu0
    %154 = vmatprep.mubr.f32.mxu0 0.0
    %155 = vmatmul.mubr.f32.gmra.mrb[0].mxu0 %v83
    %v156 = vpop.f32.mrb[0].mxu0
    %v157 = vadd.f32 %v76, %v156
    %v158 = vpop.f32.mrb[0].mxu0
    %159 = vdwg.mxu0
    %v160 = vmul.f32 %v65, %v65
    %v161 = vmul.f32 %v66, %v66
    %v162 = vld [vmem:[#allocation7] sm:$0xff]
    %v163 = vld [vmem:[#allocation7 + $0x8] sm:$0xff]
    %v164 = vld [vmem:[#allocation7 + $0x10] sm:$0xff]
    %v165 = vld [vmem:[#allocation7 + $0x18] sm:$0xff]
    %v166 = vld [vmem:[%s4] sm:$0x1]
    %v168 = vlaneseq
    %v169 = vshrl.u32 %v168, 7
    %v170 = vsub.s32 0, %v169
    %v171 = vrot.slane %v166, %v170
    %v174 = vsel %vm78, %v160, 0
    %v177 = vsel %vm78, %v161, 0
    %179 = vmatprep.subr.mxu0 0.0
    %180 = vmatpush1.msra.mxu0 %v162
    %181 = vmatprep.subr.mxu0 0.0
    %182 = vmatpush1.msra.mxu0 %v163
    %183 = vmatprep.subr.mxu0 0.0
    %184 = vmatpush1.msra.mxu0 %v164
    %185 = vmatprep.subr.mxu0 0.0
    %186 = vmatpush1.msra.mxu0 %v165
    %187 = vmatprep.subr.mxu0 0.0
    %188 = vmatpush1.msra.mxu0 0.0
    %189 = vmatprep.subr.mxu0 0.0
    %190 = vmatpush1.msra.mxu0 0.0
    %191 = vmatprep.subr.mxu0 0.0
    %192 = vmatpush1.msra.mxu0 0.0
    %193 = vmatprep.subr.mxu0 0.0
    %194 = vmatpush1.msra.mxu0 0.0
    %195 = vmatprep.subr.mxu0 0.0
    %196 = vmatpush1.msra.mxu0 0.0
    %197 = vmatprep.subr.mxu0 0.0
    %198 = vmatpush1.msra.mxu0 0.0
    %199 = vmatprep.subr.mxu0 0.0
    %200 = vmatpush1.msra.mxu0 0.0
    %201 = vmatprep.subr.mxu0 0.0
    %202 = vmatpush1.msra.mxu0 0.0
    %203 = vmatprep.subr.mxu0 0.0
    %204 = vmatpush1.msra.mxu0 0.0
    %205 = vmatprep.subr.mxu0 0.0
    %206 = vmatpush1.msra.mxu0 0.0
    %207 = vmatprep.subr.mxu0 0.0
    %208 = vmatpush1.msra.mxu0 0.0
    %209 = vmatprep.subr.mxu0 0.0
    %210 = vmatpush1.msra.mxu0 0.0
    %211 = vmatprep.subr.mxu0 0.0
    %212 = vmatpush1.msra.mxu0 0.0
    %213 = vmatprep.subr.mxu0 0.0
    %214 = vmatpush1.msra.mxu0 0.0
    %215 = vmatprep.subr.mxu0 0.0
    %216 = vmatpush1.msra.mxu0 0.0
    %217 = vmatprep.subr.mxu0 0.0
    %218 = vmatpush1.msra.mxu0 0.0
    %219 = vmatprep.subr.mxu0 0.0
    %220 = vmatpush1.msra.mxu0 0.0
    %221 = vmatprep.subr.mxu0 0.0
    %222 = vmatpush1.msra.mxu0 0.0
    %223 = vmatprep.subr.mxu0 0.0
    %224 = vmatpush1.msra.mxu0 0.0
    %225 = vmatprep.subr.mxu0 0.0
    %226 = vmatpush1.msra.mxu0 0.0
    %227 = vmatprep.subr.mxu0 0.0
    %228 = vmatpush1.msra.mxu0 0.0
    %229 = vmatprep.subr.mxu0 0.0
    %230 = vmatpush1.msra.mxu0 0.0
    %231 = vmatprep.subr.mxu0 0.0
    %232 = vmatpush1.msra.mxu0 0.0
    %233 = vmatprep.subr.mxu0 0.0
    %234 = vmatpush1.msra.mxu0 0.0
    %235 = vmatprep.subr.mxu0 0.0
    %236 = vmatpush1.msra.mxu0 0.0
    %237 = vmatprep.subr.mxu0 0.0
    %238 = vmatpush1.msra.mxu0 0.0
    %239 = vmatprep.subr.mxu0 0.0
    %240 = vmatpush1.msra.mxu0 0.0
    %241 = vmatprep.subr.mxu0 0.0
    %242 = vmatpush1.msra.mxu0 0.0
    %243 = vmatprep.mubr.f32.mxu0 0.0
    %244 = vmatmul.mubr.f32.gmra.mrb[0].mxu0 %v174
    %v245 = vpop.f32.mrb[0].mxu0
    %v246 = vadd.f32 %v171, %v245
    %v247 = vpop.f32.mrb[0].mxu0
    %248 = vmatprep.mubr.f32.mxu0 0.0
    %249 = vmatmul.mubr.f32.gmra.mrb[0].mxu0 %v177
    %v250 = vpop.f32.mrb[0].mxu0
    %v251 = vadd.f32 %v171, %v250
    %v252 = vpop.f32.mrb[0].mxu0
    %253 = vdwg.mxu0
    %v254 = vld [vmem:[%s5] sm:$0xff]
    %v255 = vld [vmem:[%s5 + $0x8] sm:$0xff]
    %v256 = vrsqrt.pop %v246
    %v257 = vmul.f32 %v246, %v256
    %vm258 = vcmp.eq.f32.partialorder %v246, inf
    %v259 = vsel %vm258, %v246, %v257
    %vm260 = vcmp.eq.f32.partialorder %v246, 0.0
    %v261 = vand.u32 %v246, 2147483648
    %v262 = vsel %vm260, %v261, %v259
    %v263 = vrsqrt.pop %v251
    %v264 = vmul.f32 %v251, %v263
    %vm265 = vcmp.eq.f32.partialorder %v251, inf
    %v266 = vsel %vm265, %v251, %v264
    %vm267 = vcmp.eq.f32.partialorder %v251, 0.0
    %v268 = vand.u32 %v251, 2147483648
    %v269 = vsel %vm267, %v268, %v266
    %v270 = vmul.f32 %v254, %v262
    %v271 = vmul.f32 %v255, %v269
    %v272 = vadd.f32 %v152, %v270
    %v273 = vadd.f32 %v157, %v271
    %274 = vst [vmem:[#allocation8] sm:$0xff] %v272
    %275 = vst [vmem:[#allocation8 + $0x8] sm:$0xff] %v273
    // Predicated region
    $region38: #{tpu_custom_call.1} parent=1 // pred_check
      _
    $region39: #{tpu_custom_call.1} parent=1 // pred_check_branch
      %277 = sbr.rel (0) target = $region41
    $region40: #{tpu_custom_call.1} parent=1 // pred_region
      %s279 = ssub.s32 256, 256
      %280 = vsyncadd [#allocation4], %s279
      %s281 = sshll.u32 [#allocation8], 4
      %s282 = int_to_ptr.vmem [resolvable:$true] %s281
      %287 = dma.vmem_to_hbm [thread:$0]  %s282, 256, %s6, [#allocation4], 128, 128, 8
    $region41: #{tpu_custom_call.1} parent=1 // pred_fallthru
      _
    // Predicated region
    $region42: #{tpu_custom_call.1} parent=1 // pred_check
      _
    $region43: #{tpu_custom_call.1} parent=1 // pred_check_branch
      %289 = sbr.rel (0) target = $region45
    $region44: #{tpu_custom_call.1} parent=1 // pred_region
      %290 = dma.done [#allocation4], 256
    $region45: #{tpu_custom_call.1} parent=1 // pred_fallthru
      _
    %291 = vsyncpa [#allocation3], 1
    %292 = vsyncpa [#allocation6], 1
    %293 = vsyncpa [#allocation4], 1

</llo_original>
